<compile_context>
chip_gen: v6e
topology: v6e:2x2x1
jax: 0.10.0
libtpu: 0.0.40
codegen_flags: <defaults>
</compile_context>

<pallas_src>
import math
from functools import partial

import jax
import jax.numpy as jnp
from jax import lax
from jax.experimental import pallas as pl
from jax.experimental.pallas import tpu as pltpu


# ------------------------------ helpers --------------------------------------

def _pick_tile(dim, preferred, align):
    """Largest multiple of `align` <= `preferred` that evenly divides `dim`.
    Falls back to the full dimension (always a legal BlockSpec block)."""
    if dim <= preferred:
        return dim
    t = (preferred // align) * align
    while t >= align:
        if dim % t == 0:
            return t
        t -= align
    return dim


def _vmem_limit_bytes():
    """Half of the per-core VMEM capacity (raises v5e's 16 MiB scoped default,
    stays inside v7x's 64 MiB physical budget)."""
    try:
        return int(pltpu.get_tpu_info().vmem_capacity_bytes // 2)
    except Exception:
        return None


def _compiler_params(dims):
    kw = dict(dimension_semantics=dims)
    lim = _vmem_limit_bytes()
    if lim is not None:
        kw["vmem_limit_bytes"] = lim
    return pltpu.CompilerParams(**kw)


# ---------------------------- linear projection ------------------------------

def linear_kernel(x_ref, w_ref, b_ref, o_ref, acc_ref):
    # x: (tm, tk), w: (tk, tn) bf16 pre-transposed, b: (1, tn) f32.
    k = pl.program_id(2)

    @pl.when(k == 0)
    def _():
        acc_ref[...] = jnp.zeros_like(acc_ref)

    x = x_ref[...].astype(jnp.bfloat16)
    w = w_ref[...].astype(jnp.bfloat16)
    acc_ref[...] += jnp.dot(x, w, preferred_element_type=jnp.float32)

    @pl.when(k == pl.num_programs(2) - 1)
    def _():
        o_ref[...] = (acc_ref[...] + b_ref[...]).astype(o_ref.dtype)


def linear(x2d, w_t, b, *, out_dtype=jnp.float32,
           tm_pref=512, tn_pref=256, tk_pref=512):
    """x2d: (M, Din) @ w_t: (Din, Dout) [bf16, pre-transposed] + b -> (M, Dout)."""
    M, Din = x2d.shape
    Dout = w_t.shape[1]
    tm = _pick_tile(M, tm_pref, 16)
    tn = _pick_tile(Dout, tn_pref, 128)
    tk = _pick_tile(Din, tk_pref, 128)
    grid = (M // tm, Dout // tn, Din // tk)
    return pl.pallas_call(
        linear_kernel,
        out_shape=jax.ShapeDtypeStruct((M, Dout), out_dtype),
        grid_spec=pltpu.PrefetchScalarGridSpec(
            num_scalar_prefetch=0,
            grid=grid,
            in_specs=[
                pl.BlockSpec((tm, tk), lambda i, j, k: (i, k)),
                pl.BlockSpec((tk, tn), lambda i, j, k: (k, j)),
                pl.BlockSpec((1, tn), lambda i, j, k: (0, j)),
            ],
            out_specs=pl.BlockSpec((tm, tn), lambda i, j, k: (i, j)),
            scratch_shapes=[pltpu.VMEM((tm, tn), jnp.float32)],
        ),
        compiler_params=_compiler_params(("parallel", "parallel", "arbitrary")),
    )(x2d, w_t, b.reshape(1, Dout).astype(jnp.float32))


# ------------------------- fused QKV projection -------------------------------

def qkv_linear_kernel(x_ref, w_ref, b_ref, o_ref, acc_ref, *, d_out):
    # x: (tm, tk), w: (tk, 3*d_out) bf16, b: (3, 1, d_out) f32, o/acc: (3, tm, d_out).
    k = pl.program_id(1)

    @pl.when(k == 0)
    def _():
        acc_ref[...] = jnp.zeros_like(acc_ref)

    x = x_ref[...].astype(jnp.bfloat16)
    w = w_ref[...].astype(jnp.bfloat16)
    for g in range(3):                              # q / k / v planes
        acc_ref[g] = acc_ref[g] + jnp.dot(
            x, w[:, g * d_out:(g + 1) * d_out], preferred_element_type=jnp.float32)

    @pl.when(k == pl.num_programs(1) - 1)
    def _():
        o_ref[...] = (acc_ref[...] + b_ref[...]).astype(o_ref.dtype)


def fused_qkv_linear(x2d, w_qkv, b_qkv3, *, out_dtype=jnp.bfloat16,
                     tm_pref=128, tk_pref=256):
    """x2d: (M, Din) against concatenated (Din, 3D) weights -> (3, M, D) planes.
    N is untiled so the activations are streamed from HBM exactly once."""
    M, Din = x2d.shape
    Dout3 = w_qkv.shape[1]
    D = Dout3 // 3
    tm = _pick_tile(M, tm_pref, 16)
    tk = _pick_tile(Din, tk_pref, 128)
    grid = (M // tm, Din // tk)
    return pl.pallas_call(
        partial(qkv_linear_kernel, d_out=D),
        out_shape=jax.ShapeDtypeStruct((3, M, D), out_dtype),
        grid_spec=pltpu.PrefetchScalarGridSpec(
            num_scalar_prefetch=0,
            grid=grid,
            in_specs=[
                pl.BlockSpec((tm, tk), lambda i, k: (i, k)),
                pl.BlockSpec((tk, Dout3), lambda i, k: (k, 0)),
                pl.BlockSpec((3, 1, D), lambda i, k: (0, 0, 0)),
            ],
            out_specs=pl.BlockSpec((3, tm, D), lambda i, k: (0, i, 0)),
            scratch_shapes=[pltpu.VMEM((3, tm, D), jnp.float32)],
        ),
        compiler_params=_compiler_params(("parallel", "arbitrary")),
    )(x2d, w_qkv, b_qkv3)


# -------------------------- flash-style attention ----------------------------

def mha_flash_kernel(*refs, n_heads, tq, tkv, causal, has_mask):
    if has_mask:
        q_ref, k_ref, v_ref, mask_ref, o_ref, m_sc, l_sc, acc_sc = refs
    else:
        q_ref, k_ref, v_ref, o_ref, m_sc, l_sc, acc_sc = refs
        mask_ref = None

    qi = pl.program_id(1)
    ki = pl.program_id(2)

    @pl.when(ki == 0)
    def _():
        m_sc[...] = jnp.full_like(m_sc, -jnp.inf)
        l_sc[...] = jnp.zeros_like(l_sc)
        acc_sc[...] = jnp.zeros_like(acc_sc)

    d_model = q_ref.shape[-1]
    d_k = d_model // n_heads

    def tile_body():
        # 1/sqrt(d_k) is pre-folded into the Q projection weights.
        q = q_ref[...].astype(jnp.bfloat16)
        k = k_ref[...].astype(jnp.bfloat16)
        v = v_ref[...].astype(jnp.bfloat16)

        if causal:
            rows = qi * tq + lax.broadcasted_iota(jnp.int32, (tq, tkv), 0)
            cols = ki * tkv + lax.broadcasted_iota(jnp.int32, (tq, tkv), 1)
            masked = cols > rows
        elif mask_ref is not None:
            masked = mask_ref[...] == 0
        else:
            masked = None

        # NOTE: fully-masked leading kv tiles accumulate p=exp(0)=1 into l/acc;
        # this is rescaled away by alpha once an unmasked tile arrives (and a
        # fully-masked row reduces to mean(V), matching the uniform softmax of
        # the reference), so it is benign — do not "fix".
        # TODO(synk): static head unroll; if H * tq * tkv exceeds the vreg
        #             budget, move heads to a grid axis (d_k >= 128) or cap tkv.
        for h in range(n_heads):
            lo = h * d_k
            qh = q[:, lo:lo + d_k]
            kh = k[:, lo:lo + d_k]
            vh = v[:, lo:lo + d_k]

            s = lax.dot_general(qh, kh, (((1,), (1,)), ((), ())),
                                preferred_element_type=jnp.float32)  # (tq, tkv)
            if masked is not None:
                s = jnp.where(masked, jnp.float32(-1e9), s)

            m_prev = m_sc[h]
            m_new = jnp.maximum(m_prev, s.max(axis=-1, keepdims=True))
            alpha = jnp.exp(m_prev - m_new)
            p = jnp.exp(s - m_new)
            l_sc[h] = alpha * l_sc[h] + p.sum(axis=-1, keepdims=True)
            acc_sc[:, lo:lo + d_k] = alpha * acc_sc[:, lo:lo + d_k] + jnp.dot(
                p.astype(jnp.bfloat16), vh, preferred_element_type=jnp.float32)
            m_sc[h] = m_new

    if causal:
        # Skip kv tiles strictly above the diagonal (their DMA is also skipped
        # by the clamped k/v index_map).
        @pl.when(ki * tkv <= qi * tq + (tq - 1))
        def _():
            tile_body()
    else:
        tile_body()

    @pl.when(ki == pl.num_programs(2) - 1)
    def _():
        for h in range(n_heads):
            lo = h * d_k
            acc_sc[:, lo:lo + d_k] = acc_sc[:, lo:lo + d_k] * pl.reciprocal(
                l_sc[h], approx=True)
        o_ref[...] = acc_sc[...].astype(o_ref.dtype)   # one lane-dense store


def _attention_call(arrs, planes, mask, n_heads, *, causal=False,
                    tq_pref=256, tkv_pref=256, out_dtype=jnp.bfloat16):
    """arrs = (q, k, v). Each is either (B, S, D) (plane=None) or the fused
    (3, B, S, D) plane stack (plane in {0,1,2}); the same array may be passed
    three times for the fused case."""
    if planes[0] is None:
        B, S, D = arrs[0].shape
    else:
        _, B, S, D = arrs[0].shape
    d_k = D // n_heads
    tq = _pick_tile(S, tq_pref, 32)
    tkv = _pick_tile(S, tkv_pref, 128)
    grid = (B, S // tq, S // tkv)

    def kv_row(qi, ki):
        if causal:
            return jnp.minimum(ki, ((qi + 1) * tq - 1) // tkv)
        return ki

    def spec_for(plane, is_q):
        row = (lambda qi, ki: qi) if is_q else kv_row
        t = tq if is_q else tkv
        if plane is None:
            return pl.BlockSpec(
                (None, t, D), lambda b, qi, ki, row=row: (b, row(qi, ki), 0))
        return pl.BlockSpec(
            (None, None, t, D),
            lambda b, qi, ki, p=plane, row=row: (p, b, row(qi, ki), 0))

    in_specs = [spec_for(planes[0], True),
                spec_for(planes[1], False),
                spec_for(planes[2], False)]
    inputs = list(arrs)
    has_mask = (not causal) and (mask is not None)
    if has_mask:
        # (B, 1, S, S) broadcast-over-heads mask -> int8 (B, S, S): 1 byte/elem.
        mask_i8 = jnp.broadcast_to(mask, (B, 1, S, S)).reshape(B, S, S).astype(jnp.int8)
        in_specs.append(pl.BlockSpec((None, tq, tkv), lambda b, qi, ki: (b, qi, ki)))
        inputs.append(mask_i8)

    kernel = partial(mha_flash_kernel, n_heads=n_heads, tq=tq, tkv=tkv,
                     causal=causal, has_mask=has_mask)

    return pl.pallas_call(
        kernel,
        out_shape=jax.ShapeDtypeStruct((B, S, D), out_dtype),
        grid_spec=pltpu.PrefetchScalarGridSpec(
            num_scalar_prefetch=0,
            grid=grid,
            in_specs=in_specs,
            out_specs=pl.BlockSpec((None, tq, D), lambda b, qi, ki: (b, qi, 0)),
            scratch_shapes=[
                pltpu.VMEM((n_heads, tq, 1), jnp.float32),   # running max m
                pltpu.VMEM((n_heads, tq, 1), jnp.float32),   # running denom l
                pltpu.VMEM((tq, D), jnp.float32),            # lane-dense accum
            ],
        ),
        compiler_params=_compiler_params(("parallel", "parallel", "arbitrary")),
    )(*inputs)


# ------------------------------ module wrapper -------------------------------

def init_params(key, d_model):
    """Same init as the PyTorch nn.Linear layers; weights stored pre-transposed
    (Din, Dout), f32. Used directly by the pure-JAX reference."""
    ks = jax.random.split(key, 8)
    bound = 1.0 / math.sqrt(d_model)

    def lin(kw, kb):
        w = jax.random.uniform(kw, (d_model, d_model), jnp.float32, -bound, bound)
        b = jax.random.uniform(kb, (d_model,), jnp.float32, -bound, bound)
        return w.T, b

    return {"q": lin(ks[0], ks[1]), "k": lin(ks[2], ks[3]),
            "v": lin(ks[4], ks[5]), "out": lin(ks[6], ks[7])}


def prepare_kernel_params(params, n_heads):
    """Kernel-side params: bf16 weights, 1/sqrt(d_k) folded into Wq/bq, and a
    fused (D, 3D) QKV weight for the self-attention fast path."""
    wq, bq = params["q"]
    wk, bk = params["k"]
    wv, bv = params["v"]
    wo, bo = params["out"]
    d_model = wq.shape[0]
    scale = 1.0 / math.sqrt(d_model // n_heads)
    wq_s, bq_s = wq * scale, bq * scale
    bf = lambda a: a.astype(jnp.bfloat16)
    return {
        "w_qkv": bf(jnp.concatenate([wq_s, wk, wv], axis=1)),          # (D, 3D)
        "b_qkv": jnp.stack([bq_s, bk, bv]).reshape(3, 1, d_model).astype(jnp.float32),
        "w_q": bf(wq_s), "b_q": bq_s,
        "w_k": bf(wk), "b_k": bk,
        "w_v": bf(wv), "b_v": bv,
        "w_out": bf(wo), "b_out": bo,
    }


def multi_head_attention(kp, query, key, value, mask, n_heads, *, causal=False):
    """query/key/value: (B, S, D); mask: (B, 1, S, S) or None -> (B, S, D)."""
    B, S, D = query.shape
    if (query is key) and (key is value):
        # Self-attention: fused QKV projection, activations read from HBM once.
        qkv = fused_qkv_linear(query.reshape(B * S, D), kp["w_qkv"], kp["b_qkv"])
        qkv = qkv.reshape(3, B, S, D)
        x = _attention_call((qkv, qkv, qkv), (0, 1, 2), mask, n_heads, causal=causal)
    else:
        q = linear(query.reshape(B * S, D), kp["w_q"], kp["b_q"],
                   out_dtype=jnp.bfloat16).reshape(B, S, D)
        k = linear(key.reshape(B * S, D), kp["w_k"], kp["b_k"],
                   out_dtype=jnp.bfloat16).reshape(B, S, D)
        v = linear(value.reshape(B * S, D), kp["w_v"], kp["b_v"],
                   out_dtype=jnp.bfloat16).reshape(B, S, D)
        x = _attention_call((q, k, v), (None, None, None), mask, n_heads, causal=causal)
    out = linear(x.reshape(B * S, D), kp["w_out"], kp["b_out"], out_dtype=jnp.float32)
    return out.reshape(B, S, D)


# ------------------------------ pure-JAX reference ---------------------------

def reference_forward(params, query, key, value, mask, n_heads):
    hi = lax.Precision.HIGHEST

    def lin(x, w_t, b):
        return jnp.einsum("bsd,de->bse", x, w_t, precision=hi) + b

    B, S, D = query.shape
    d_k = D // n_heads

    def heads(t):
        return t.reshape(B, S, n_heads, d_k).transpose(0, 2, 1, 3)

    q = heads(lin(query, *params["q"]))
    k = heads(lin(key, *params["k"]))
    v = heads(lin(value, *params["v"]))
    s = jnp.einsum("bhqd,bhkd->bhqk", q, k, precision=hi) / math.sqrt(d_k)
    s = jnp.where(mask == 0, jnp.float32(-1e9), s)
    w = jax.nn.softmax(s, axis=-1)
    x = jnp.einsum("bhqk,bhkd->bhqd", w, v, precision=hi)
    x = x.transpose(0, 2, 1, 3).reshape(B, S, D)
    return lin(x, *params["out"])


# ----------------------------------- main ------------------------------------

if __name__ == "__main__":
    B, S, D, H = 2, 8, 32, 4

    root = jax.random.PRNGKey(0)
    k_param, k_q, k_k, k_v = jax.random.split(root, 4)

    params = init_params(k_param, D)
    kparams = prepare_kernel_params(params, H)

    query = jax.random.normal(k_q, (B, S, D), jnp.float32)
    key_in = jax.random.normal(k_k, (B, S, D), jnp.float32)
    value = jax.random.normal(k_v, (B, S, D), jnp.float32)

    causal_2d = jnp.tril(jnp.ones((S, S), jnp.int32))
    mask = jnp.broadcast_to(causal_2d[None, None, :, :], (B, 1, S, S))

    # 1) General path: distinct q/k/v inputs + explicit mask (module semantics).
    out = multi_head_attention(kparams, query, key_in, value, mask, n_heads=H)
    jax.block_until_ready(out)
    assert out.shape == (B, S, D)
    ref = reference_forward(params, query, key_in, value, mask, H)
    err = float(jnp.max(jnp.abs(out - ref)))
    assert jnp.allclose(out, ref, atol=2e-2, rtol=2e-2), f"general path max_err={err}"

    # 2) Self-attention fast path: fused QKV projection + in-kernel causal mask.
    out2 = multi_head_attention(kparams, query, query, query, None, n_heads=H,
                                causal=True)
    jax.block_until_ready(out2)
    ref2 = reference_forward(params, query, query, query, mask, H)
    err2 = float(jnp.max(jnp.abs(out2 - ref2)))
    assert jnp.allclose(out2, ref2, atol=2e-2, rtol=2e-2), f"fused/causal max_err={err2}"

    print("KERNEL_OK")
</pallas_src>

<mosaic_0001>
module attributes {stable_mosaic.version = 11 : i64} {
  func.func @linear_kernel(%arg0: i32, %arg1: i32, %arg2: i32, %arg3: memref<16x32xf32, #tpu.memory_space<vmem>>, %arg4: memref<32x32xbf16, #tpu.memory_space<vmem>>, %arg5: memref<1x32xf32, #tpu.memory_space<vmem>>, %arg6: memref<16x32xbf16, #tpu.memory_space<vmem>>, %arg7: memref<16x32xf32, #tpu.memory_space<vmem>>) attributes {dimension_semantics = [#tpu.dimension_semantics<parallel>, #tpu.dimension_semantics<parallel>, #tpu.dimension_semantics<arbitrary>], iteration_bounds = array<i64: 1, 1, 1>, scalar_prefetch = 0 : i64, scratch_operands = 1 : i64, tpu.core_type = #tpu.core_type<tc>, window_params = [{transform_indices = @transform_0, window_bounds = array<i64: 16, 32>}, {transform_indices = @transform_1, window_bounds = array<i64: 32, 32>}, {transform_indices = @transform_2, window_bounds = array<i64: 1, 32>}, {transform_indices = @transform_3, window_bounds = array<i64: 16, 32>}]} {
    %c0_i32 = arith.constant 0 : i32
    %0 = arith.cmpi eq, %arg2, %c0_i32 : i32
    %1 = arith.extui %0 : i1 to i32
    %c0_i32_0 = arith.constant 0 : i32
    %2 = arith.cmpi ne, %1, %c0_i32_0 : i32
    scf.if %2 {
      %cst_10 = arith.constant 0.000000e+00 : f32
      %13 = vector.broadcast %cst_10 : f32 to vector<16x32xf32>
      %c0_11 = arith.constant 0 : index
      %c0_12 = arith.constant 0 : index
      %14 = vector.load %arg7[%c0_11, %c0_12] : memref<16x32xf32, #tpu.memory_space<vmem>>, vector<16x32xf32>
      tpu.vector_store %arg7[%c0_11, %c0_12], %13 {strides = array<i32>} : memref<16x32xf32, #tpu.memory_space<vmem>>, vector<16x32xf32>,
    } else {
    }
    %c0 = arith.constant 0 : index
    %c0_1 = arith.constant 0 : index
    %3 = vector.load %arg3[%c0, %c0_1] : memref<16x32xf32, #tpu.memory_space<vmem>>, vector<16x32xf32>
    %4 = arith.truncf %3 : vector<16x32xf32> to vector<16x32xbf16>
    %c0_2 = arith.constant 0 : index
    %c0_3 = arith.constant 0 : index
    %5 = vector.load %arg4[%c0_2, %c0_3] : memref<32x32xbf16, #tpu.memory_space<vmem>>, vector<32x32xbf16>
    %c0_4 = arith.constant 0 : index
    %c0_5 = arith.constant 0 : index
    %6 = vector.load %arg7[%c0_4, %c0_5] : memref<16x32xf32, #tpu.memory_space<vmem>>, vector<16x32xf32>
    %cst = arith.constant dense<0.000000e+00> : vector<16x32xf32>
    %7 = tpu.matmul %4, %5, %cst {dimension_numbers = #tpu.dot_dimension_numbers<[1], [0], [0], [1], [0, 0, 1, 1], [], []>} : vector<16x32xbf16>, vector<32x32xbf16>, vector<16x32xf32> -> vector<16x32xf32>
    %8 = arith.addf %6, %7 : vector<16x32xf32>
    %c0_6 = arith.constant 0 : index
    %c0_7 = arith.constant 0 : index
    %9 = vector.load %arg7[%c0_6, %c0_7] : memref<16x32xf32, #tpu.memory_space<vmem>>, vector<16x32xf32>
    tpu.vector_store %arg7[%c0_6, %c0_7], %8 {strides = array<i32>} : memref<16x32xf32, #tpu.memory_space<vmem>>, vector<16x32xf32>,
    %c0_i32_8 = arith.constant 0 : i32
    %10 = arith.cmpi eq, %arg2, %c0_i32_8 : i32
    %11 = arith.extui %10 : i1 to i32
    %c0_i32_9 = arith.constant 0 : i32
    %12 = arith.cmpi ne, %11, %c0_i32_9 : i32
    scf.if %12 {
      %c0_10 = arith.constant 0 : index
      %c0_11 = arith.constant 0 : index
      %13 = vector.load %arg7[%c0_10, %c0_11] : memref<16x32xf32, #tpu.memory_space<vmem>>, vector<16x32xf32>
      %c0_12 = arith.constant 0 : index
      %c0_13 = arith.constant 0 : index
      %14 = vector.load %arg5[%c0_12, %c0_13] : memref<1x32xf32, #tpu.memory_space<vmem>>, vector<1x32xf32>
      %15 = vector.broadcast %14 : vector<1x32xf32> to vector<16x32xf32>
      %16 = arith.addf %13, %15 : vector<16x32xf32>
      %17 = arith.truncf %16 : vector<16x32xf32> to vector<16x32xbf16>
      %c0_14 = arith.constant 0 : index
      %c0_15 = arith.constant 0 : index
      %18 = vector.load %arg6[%c0_14, %c0_15] : memref<16x32xbf16, #tpu.memory_space<vmem>>, vector<16x32xbf16>
      tpu.vector_store %arg6[%c0_14, %c0_15], %17 {strides = array<i32>} : memref<16x32xbf16, #tpu.memory_space<vmem>>, vector<16x32xbf16>,
    } else {
    }
    return
  }
  func.func @transform_0(%arg0: i32, %arg1: i32, %arg2: i32) -> (i32, i32) {
    %c0_i32 = arith.constant 0 : i32
    return %arg0, %arg2 : i32, i32
  }
  func.func @transform_1(%arg0: i32, %arg1: i32, %arg2: i32) -> (i32, i32) {
    %c0_i32 = arith.constant 0 : i32
    return %arg2, %arg1 : i32, i32
  }
  func.func @transform_2(%arg0: i32, %arg1: i32, %arg2: i32) -> (i32, i32) {
    %c0_i32 = arith.constant 0 : i32
    %c0_i32_0 = arith.constant 0 : i32
    return %c0_i32, %arg1 : i32, i32
  }
  func.func @transform_3(%arg0: i32, %arg1: i32, %arg2: i32) -> (i32, i32) {
    %c0_i32 = arith.constant 0 : i32
    return %arg0, %arg1 : i32, i32
  }
}

</mosaic_0001>

<llo_original>
// kernel: tpu_custom_call.1
$region0: #{tpu_custom_call.1}
  #allocation0 [shape = 'u32[]', space=smem, size = 0x4, offset = 0x4, fixed_abs, tag = 'smem constant byte address 0x4 - core index']
  #allocation1 [shape = 'u32[144,128]{1,0:T(1,128)}', space=vmem, size = 0x12000, scoped, tag = 'internal scratch']
  #allocation2 [shape = 'f32[16,32]{1,0:T(8,128)}', space=vmem, size = 0x2000, scoped, tag = 'scratch operand']
  %s0 = inlined_call_operand.hbm [shape: f32[16,32], index: 0, kind: input, shape index: {}]
  %s1 = inlined_call_operand.hbm [shape: bf16[32,32], index: 1, kind: input, shape index: {}]
  %s2 = inlined_call_operand.vmem [shape: f32[1,32], index: 2, kind: input, shape index: {}]
  %s3 = inlined_call_operand.hbm [shape: bf16[16,32], index: 3, kind: output, shape index: {}]
  %s4 = sld [smem:[#allocation0]]
  $region38: #{tpu_custom_call.1} parent=0
    _
  %s6 = ssub.s32 1, %s4
  %s7 = scalar_select 0, %s6, %s4
  $region1: #{tpu_custom_call.1} parent=0
    #allocation3 [shape = 'u8[8192]{0}', space=vmem, size = 0x2000, scoped, tag = 'input window, operand 0, single buffered']
    #allocation4 [shape = 's32[1]{0}', space=sflag, size = 0x4, scoped, tag = 'scoped memory for tpu_custom_call.1']
    #allocation5 [shape = 's32[1]{0}', space=sflag, size = 0x4, scoped, tag = 'scoped memory for tpu_custom_call.1']
    #allocation6 [shape = 'u8[8192]{0}', space=vmem, size = 0x2000, scoped, tag = 'input window, operand 1, single buffered']
    #allocation7 [shape = 's32[1]{0}', space=sflag, size = 0x4, scoped, tag = 'scoped memory for tpu_custom_call.1']
    #allocation8 [shape = 'u8[4096]{0}', space=vmem, size = 0x1000, scoped, tag = 'output window, operand 0, single buffered']
    %8 = vsyncpa [#allocation4], 0
    %9 = vsyncpa [#allocation7], 0
    %10 = vsyncpa [#allocation5], 0
    // Predicated region
    $region2: #{tpu_custom_call.1} parent=1 // pred_check
      _
    $region3: #{tpu_custom_call.1} parent=1 // pred_check_branch
      %12 = sbr.rel (0) target = $region5
    $region4: #{tpu_custom_call.1} parent=1 // pred_region
      %s14 = ssub.s32 256, 256
      %15 = vsyncadd [#allocation4], %s14
      %s16 = sshll.u32 [#allocation3], 4
      %s17 = int_to_ptr.vmem [resolvable:$true] %s16
      %22 = dma.hbm_to_vmem [thread:$0]  %s0, 256, %s17, [#allocation4], 128, 128, 8
    $region5: #{tpu_custom_call.1} parent=1 // pred_fallthru
      _
    // Predicated region
    $region6: #{tpu_custom_call.1} parent=1 // pred_check
      _
    $region7: #{tpu_custom_call.1} parent=1 // pred_check_branch
      %24 = sbr.rel (0) target = $region9
    $region8: #{tpu_custom_call.1} parent=1 // pred_region
      %s26 = ssub.s32 256, 256
      %27 = vsyncadd [#allocation7], %s26
      %s28 = sshll.u32 [#allocation6], 4
      %s29 = int_to_ptr.vmem [resolvable:$true] %s28
      %34 = dma.hbm_to_vmem [thread:$0]  %s1, 256, %s29, [#allocation7], 64, 64, 4
    $region9: #{tpu_custom_call.1} parent=1 // pred_fallthru
      _
    // Predicated region
    $region10: #{tpu_custom_call.1} parent=1 // pred_check
      _
    $region11: #{tpu_custom_call.1} parent=1 // pred_check_branch
      %36 = sbr.rel (0) target = $region13
    $region12: #{tpu_custom_call.1} parent=1 // pred_region
      _
    $region13: #{tpu_custom_call.1} parent=1 // pred_fallthru
      _
    // Predicated region
    $region14: #{tpu_custom_call.1} parent=1 // pred_check
      _
    $region15: #{tpu_custom_call.1} parent=1 // pred_check_branch
      %38 = sbr.rel (0) target = $region17
    $region16: #{tpu_custom_call.1} parent=1 // pred_region
      %39 = dma.done [#allocation4], 256
    $region17: #{tpu_custom_call.1} parent=1 // pred_fallthru
      _
    // Predicated region
    $region18: #{tpu_custom_call.1} parent=1 // pred_check
      _
    $region19: #{tpu_custom_call.1} parent=1 // pred_check_branch
      %41 = sbr.rel (0) target = $region21
    $region20: #{tpu_custom_call.1} parent=1 // pred_region
      %42 = dma.done [#allocation7], 256
    $region21: #{tpu_custom_call.1} parent=1 // pred_fallthru
      _
    %p44 = scmp.eq.s32.totalorder 0, 0
    // Predicated region
    $region22: #{tpu_custom_call.1} parent=1 // pred_check
      %p45 = pneg %p44
    $region23: #{tpu_custom_call.1} parent=1 // pred_check_branch
      %47 = sbr.rel (%p45) target = $region25
    $region24: #{tpu_custom_call.1} parent=1 // pred_region
      %vm48 = vcmask 261120
      %49 = vst.msk [vmem:[#allocation2] sm:$0xff] %vm48, 0.0
      %50 = vst.msk [vmem:[#allocation2 + $0x8] sm:$0xff] %vm48, 0.0
    $region25: #{tpu_custom_call.1} parent=1 // pred_fallthru
      _
    %v51 = vld [vmem:[#allocation3] sm:$0xff]
    %v52 = vld [vmem:[#allocation3 + $0x8] sm:$0xff]
    %v53 = vpack.c.bf16 %v52, %v51
    %v54 = vld [vmem:[#allocation6] sm:$0xf]
    %v55 = vld [vmem:[#allocation6 + $0x4] sm:$0xf]
    %v56 = vld [vmem:[#allocation6 + $0x8] sm:$0xf]
    %v57 = vld [vmem:[#allocation6 + $0xc] sm:$0xf]
    %v58 = vld [vmem:[#allocation2] sm:$0xff]
    %v59 = vld [vmem:[#allocation2 + $0x8] sm:$0xff]
    %v64 = vunpack.c.l.b16 %v54
    %v65 = vunpack.c.l.b16 %v55
    %v66 = vunpack.c.l.b16 %v56
    %v67 = vunpack.c.l.b16 %v57
    %v68 = vpack.c.b16 %v65, %v64
    %v69 = vpack.c.b16 %v67, %v66
    %vm72 = vcmask 261120
    %v74 = vsel %vm72, %v53, 0
    %76 = vmatprep.subr.bf16.mxu0 0
    %77 = vmatpush1.bf16.msra.mxu0 0
    %78 = vmatprep.subr.bf16.mxu0 0
    %79 = vmatpush1.bf16.msra.mxu0 0
    %80 = vmatprep.subr.bf16.mxu0 0
    %81 = vmatpush1.bf16.msra.mxu0 0
    %82 = vmatprep.subr.bf16.mxu0 0
    %83 = vmatpush1.bf16.msra.mxu0 0
    %84 = vmatprep.subr.bf16.mxu0 0
    %85 = vmatpush1.bf16.msra.mxu0 0
    %86 = vmatprep.subr.bf16.mxu0 0
    %87 = vmatpush1.bf16.msra.mxu0 0
    %88 = vmatprep.subr.bf16.mxu0 0
    %89 = vmatpush1.bf16.msra.mxu0 %v69
    %90 = vmatprep.subr.bf16.mxu0 0
    %91 = vmatpush1.bf16.msra.mxu0 %v68
    %92 = vmatprep.subr.bf16.mxu0 0
    %93 = vmatpush2.bf16.msra.mxu0 0
    %94 = vmatprep.subr.bf16.mxu0 0
    %95 = vmatpush2.bf16.msra.mxu0 0
    %96 = vmatprep.subr.bf16.mxu0 0
    %97 = vmatpush2.bf16.msra.mxu0 0
    %98 = vmatprep.subr.bf16.mxu0 0
    %99 = vmatpush2.bf16.msra.mxu0 0
    %100 = vmatprep.subr.bf16.mxu0 0
    %101 = vmatpush2.bf16.msra.mxu0 0
    %102 = vmatprep.subr.bf16.mxu0 0
    %103 = vmatpush2.bf16.msra.mxu0 0
    %104 = vmatprep.subr.bf16.mxu0 0
    %105 = vmatpush2.bf16.msra.mxu0 0
    %106 = vmatprep.subr.bf16.mxu0 0
    %107 = vmatpush2.bf16.msra.mxu0 0
    %108 = vmatprep.mubr.bf16.mxu0 0
    %109 = vmatmul.mubr.bf16.gmra.mxu0 %v74
    %v110 = vpop.f32.mrf.mxu0
    %v111 = vadd.f32 0.0, %v110
    %v112 = vpop.f32.mrf.mxu0
    %v113 = vpop.f32.mrf.mxu0
    %v114 = vadd.f32 0.0, %v113
    %v115 = vpop.f32.mrf.mxu0
    %116 = vdwg.mxu0
    %v117 = vadd.f32 %v58, %v111
    %v118 = vadd.f32 %v59, %v114
    %119 = vst.msk [vmem:[#allocation2] sm:$0xff] %vm72, %v117
    %120 = vst.msk [vmem:[#allocation2 + $0x8] sm:$0xff] %vm72, %v118
    // Predicated region
    $region26: #{tpu_custom_call.1} parent=1 // pred_check
      %p121 = pneg %p44
    $region27: #{tpu_custom_call.1} parent=1 // pred_check_branch
      %123 = sbr.rel (%p121) target = $region29
    $region28: #{tpu_custom_call.1} parent=1 // pred_region
      %v124 = vld [vmem:[#allocation2] sm:$0xff]
      %v125 = vld [vmem:[#allocation2 + $0x8] sm:$0xff]
      %v126 = vld [vmem:[%s2] sm:$0x1]
      %v128 = vlaneseq
      %v129 = vshrl.u32 %v128, 7
      %v130 = vsub.s32 0, %v129
      %v131 = vrot.slane %v126, %v130
      %v133 = vadd.f32 %v124, %v131
      %v134 = vadd.f32 %v125, %v131
      %v135 = vpack.c.bf16 %v134, %v133
      %v137 = vunpack.c.l.b16 %v135
      %v138 = vunpack.c.h.b16 %v135
      %v139 = vpack.c.b16 %v137, %v137
      %v140 = vpack.c.b16 %v138, %v138
      %vm143 = vcmask 257024
      %144 = vst.msk [vmem:[#allocation8] sm:$0xf] %vm143, %v139
      %145 = vst.msk [vmem:[#allocation8 + $0x4] sm:$0xf] %vm143, %v140
    $region29: #{tpu_custom_call.1} parent=1 // pred_fallthru
      _
    // Predicated region
    $region30: #{tpu_custom_call.1} parent=1 // pred_check
      _
    $region31: #{tpu_custom_call.1} parent=1 // pred_check_branch
      %147 = sbr.rel (0) target = $region33
    $region32: #{tpu_custom_call.1} parent=1 // pred_region
      %s149 = ssub.s32 128, 128
      %150 = vsyncadd [#allocation5], %s149
      %s151 = sshll.u32 [#allocation8], 4
      %s152 = int_to_ptr.vmem [resolvable:$true] %s151
      %157 = dma.vmem_to_hbm [thread:$0]  %s152, 128, %s3, [#allocation5], 64, 64, 4
    $region33: #{tpu_custom_call.1} parent=1 // pred_fallthru
      _
    // Predicated region
    $region34: #{tpu_custom_call.1} parent=1 // pred_check
      _
    $region35: #{tpu_custom_call.1} parent=1 // pred_check_branch
      %159 = sbr.rel (0) target = $region37
    $region36: #{tpu_custom_call.1} parent=1 // pred_region
      %160 = dma.done [#allocation5], 128
    $region37: #{tpu_custom_call.1} parent=1 // pred_fallthru
      _
    %161 = vsyncpa [#allocation4], 1
    %162 = vsyncpa [#allocation7], 1
    %163 = vsyncpa [#allocation5], 1

</llo_original>
